<compile_context>
chip_gen: v7x
topology: tpu7x:2x2x1
jax: 0.10.0
libtpu: 0.0.40
codegen_flags: <defaults>
</compile_context>

<pallas_src>
import jax
import jax.numpy as jnp
from jax.experimental import pallas as pl
from jax.experimental.pallas import tpu as pltpu


def _round_up(x, m):
    return ((x + m - 1) // m) * m


def _cdiv(a, b):
    return -(-a // b)


# ----------------------------------------------------------------------------
# Kernels
# ----------------------------------------------------------------------------
def _linear_kernel_fused(x_ref, w_ref, b_ref, o_ref):
    # Whole K in one block: single MXU pass per output tile, f32 accumulate,
    # bias added in f32, no scratch, no grid-axis init/finalize.
    acc = jnp.dot(x_ref[...], w_ref[...], preferred_element_type=jnp.float32)
    o_ref[...] = (acc + b_ref[...]).astype(o_ref.dtype)


def _linear_kernel_ksplit(x_ref, w_ref, b_ref, o_ref, acc_ref):
    # x_ref: [tm, tk] (compute dtype), w_ref: [tk, tn] (compute dtype, [K,N]),
    # b_ref: [1, tn] f32, acc_ref: VMEM f32 [tm, tn] persistent across K.
    k = pl.program_id(2)
    part = jnp.dot(x_ref[...], w_ref[...], preferred_element_type=jnp.float32)

    @pl.when(k == 0)
    def _():
        # Bias folded into the first partial: no zero-init pass, bias added once.
        acc_ref[...] = part + b_ref[...]

    @pl.when(k > 0)
    def _():
        acc_ref[...] += part

    @pl.when(k == pl.num_programs(2) - 1)
    def _():
        o_ref[...] = acc_ref[...].astype(o_ref.dtype)


# ----------------------------------------------------------------------------
# Tile selection
# ----------------------------------------------------------------------------
# Keep double-buffered inputs + output + accumulator under ~13 MiB so the
# kernel fits the scoped VMEM default on v5e (16 MiB) and v6e/v7x (32 MiB).
_VMEM_BUDGET_BYTES = 13 << 20


def _select_tiles(B, C, D, compute_itemsize, out_itemsize, tk_max=None):
    # N tile: lane-dense, multiple of 128.
    tn = min(512, _round_up(C, 128))

    # M tile: full MXU-width tiles for big batches, minimal padding for small.
    if B >= 512:
        tm = 512
    elif B >= 128:
        tm = _round_up(B, 128)
    else:
        tm = _round_up(B, 8)

    # Prefer >=2 output blocks on the parallel axes (v7x has 2 TensorCores).
    if _cdiv(B, tm) * _cdiv(C, tn) < 2 and B >= 256:
        tm = max(128, _round_up(_cdiv(B, 2), 128))

    # K tile: fold all of K into one block when it fits the VMEM budget,
    # otherwise halve (keeping 128-alignment) until it does.
    tk = _round_up(D, 128)
    if tk_max is not None:
        tk = min(tk, _round_up(tk_max, 128))

    def vmem_bytes(tk_):
        return (2 * tm * tk_ * compute_itemsize      # x, double-buffered
                + 2 * tk_ * tn * compute_itemsize    # w, double-buffered
                + 2 * tm * tn * out_itemsize         # out, double-buffered
                + tm * tn * 4                        # f32 accumulator scratch
                + 2 * 1 * tn * 4)                    # bias

    while vmem_bytes(tk) > _VMEM_BUDGET_BYTES and tk > 128:
        tk = max(128, _round_up(tk // 2, 128))

    return tm, tn, tk


# ----------------------------------------------------------------------------
# Wrapper
# ----------------------------------------------------------------------------
def linear_forward(x, weight, bias, *, compute_dtype=jnp.bfloat16,
                   force_pallas=False, tk_max=None):
    """Equivalent of torch.nn.Linear(input_dim, num_classes)(x).

    x:      [B, D]  float32
    weight: [C, D]  float32   (PyTorch layout)
    bias:   [C]     float32
    returns [B, C]  x.dtype
    """
    B, D = x.shape
    C, D2 = weight.shape
    assert D == D2, (x.shape, weight.shape)
    out_dtype = x.dtype

    # Fast path: at tiny shapes padding + kernel launch costs >> the dot itself.
    if not force_pallas and (B * C * D) < (1 << 18):
        return (x @ weight.T + bias).astype(out_dtype)

    compute_itemsize = jnp.dtype(compute_dtype).itemsize
    out_itemsize = jnp.dtype(out_dtype).itemsize
    tm, tn, tk = _select_tiles(B, C, D, compute_itemsize, out_itemsize, tk_max)

    Bp = _round_up(B, tm)
    Cp = _round_up(C, tn)   # lane-dense output (multiple of 128)
    Dp = _round_up(D, tk)
    k_steps = Dp // tk

    # Cast to the MXU-native compute dtype and zero-pad to tile-aligned shapes.
    # Weight is transposed ONCE here to the canonical [K, N] MXU orientation
    # (fused with the pad/cast copy that was already happening).
    xp = x.astype(compute_dtype)
    if (Bp, Dp) != (B, D):
        xp = jnp.pad(xp, ((0, Bp - B), (0, Dp - D)))
    wp = weight.T.astype(compute_dtype)                      # [D, C]
    if (Dp, Cp) != (D, C):
        wp = jnp.pad(wp, ((0, Dp - D), (0, Cp - C)))         # [Dp, Cp]
    bp = bias.astype(jnp.float32)
    if Cp != C:
        bp = jnp.pad(bp, (0, Cp - C))
    bp = bp.reshape(1, Cp)

    if k_steps == 1:
        # Whole K resident: 2-D grid, fused kernel, no accumulator scratch.
        grid_spec = pltpu.PrefetchScalarGridSpec(
            num_scalar_prefetch=0,
            grid=(Bp // tm, Cp // tn),
            in_specs=[
                pl.BlockSpec((tm, Dp), lambda i, j: (i, 0)),   # x  [tm, K]
                pl.BlockSpec((Dp, tn), lambda i, j: (0, j)),   # W  [K, tn]
                pl.BlockSpec((1, tn), lambda i, j: (0, j)),    # bias
            ],
            out_specs=pl.BlockSpec((tm, tn), lambda i, j: (i, j)),
        )
        kernel = _linear_kernel_fused
        dims = ("parallel", "parallel")
    else:
        # K-split reduction: K is the last ("arbitrary") grid axis.
        grid_spec = pltpu.PrefetchScalarGridSpec(
            num_scalar_prefetch=0,
            grid=(Bp // tm, Cp // tn, k_steps),
            in_specs=[
                pl.BlockSpec((tm, tk), lambda i, j, k: (i, k)),   # x  tile
                pl.BlockSpec((tk, tn), lambda i, j, k: (k, j)),   # W  tile [K, N]
                pl.BlockSpec((1, tn), lambda i, j, k: (0, j)),    # bias tile
            ],
            out_specs=pl.BlockSpec((tm, tn), lambda i, j, k: (i, j)),
            scratch_shapes=[pltpu.VMEM((tm, tn), jnp.float32)],
        )
        kernel = _linear_kernel_ksplit
        dims = ("parallel", "parallel", "arbitrary")

    out = pl.pallas_call(
        kernel,
        out_shape=jax.ShapeDtypeStruct((Bp, Cp), out_dtype),
        grid_spec=grid_spec,
        compiler_params=pltpu.CompilerParams(dimension_semantics=dims),
    )(xp, wp, bp)

    # Slice away padding (rows beyond B, lane-padding beyond C).
    return out[:B, :C]


# ----------------------------------------------------------------------------
# Self-test
# ----------------------------------------------------------------------------
if __name__ == "__main__":
    # Shapes consistent with the module: input_dim=32, num_classes=16, batch=8.
    B, D, C = 8, 32, 16

    key = jax.random.PRNGKey(0)
    kx, kw, kb = jax.random.split(key, 3)

    x = jax.random.normal(kx, (B, D), dtype=jnp.float32)
    # Mimic nn.Linear init: uniform(-1/sqrt(D), 1/sqrt(D)).
    bound = 1.0 / jnp.sqrt(jnp.float32(D))
    weight = jax.random.uniform(kw, (C, D), dtype=jnp.float32, minval=-bound, maxval=bound)
    bias = jax.random.uniform(kb, (C,), dtype=jnp.float32, minval=-bound, maxval=bound)
    y_ref = x @ weight.T + bias

    # 1) Tiny shape through the Pallas kernel (single-K fused path, bf16 compute).
    y = linear_forward(x, weight, bias, force_pallas=True)
    jax.block_until_ready(y)
    assert y.shape == (B, C), f"bad output shape {y.shape}"
    assert jnp.allclose(y, y_ref, atol=5e-2, rtol=5e-2), "mismatch (bf16 fused path)"

    # 2) Exercise the K-split accumulator path (forced tk) in f32 -> exact check.
    B2, D2, C2 = 64, 384, 96
    x2 = jax.random.normal(kx, (B2, D2), dtype=jnp.float32)
    w2 = jax.random.uniform(kw, (C2, D2), dtype=jnp.float32, minval=-0.05, maxval=0.05)
    b2 = jax.random.uniform(kb, (C2,), dtype=jnp.float32, minval=-0.05, maxval=0.05)
    y2 = linear_forward(x2, w2, b2, force_pallas=True, tk_max=128,
                        compute_dtype=jnp.float32)
    jax.block_until_ready(y2)
    y2_ref = x2 @ w2.T + b2
    assert y2.shape == (B2, C2), f"bad output shape {y2.shape}"
    assert jnp.allclose(y2, y2_ref, atol=1e-4, rtol=1e-4), "mismatch (f32 K-split path)"

    # 3) Automatic fast path for tiny problems (plain XLA dot, exact).
    y_fast = linear_forward(x, weight, bias)
    assert jnp.allclose(y_fast, y_ref, atol=1e-5, rtol=1e-5), "mismatch (fast path)"

    print("KERNEL_OK")
</pallas_src>

<mosaic_0001>
module attributes {stable_mosaic.version = 11 : i64} {
  func.func @_linear_kernel_fused(%arg0: i32, %arg1: i32, %arg2: memref<8x128xbf16, #tpu.memory_space<vmem>>, %arg3: memref<128x128xbf16, #tpu.memory_space<vmem>>, %arg4: memref<1x128xf32, #tpu.memory_space<vmem>>, %arg5: memref<8x128xf32, #tpu.memory_space<vmem>>) attributes {dimension_semantics = [#tpu.dimension_semantics<parallel>, #tpu.dimension_semantics<parallel>], iteration_bounds = array<i64: 1, 1>, scalar_prefetch = 0 : i64, scratch_operands = 0 : i64, tpu.core_type = #tpu.core_type<tc>, window_params = [{transform_indices = @transform_0, window_bounds = array<i64: 8, 128>}, {transform_indices = @transform_1, window_bounds = array<i64: 128, 128>}, {transform_indices = @transform_2, window_bounds = array<i64: 1, 128>}, {transform_indices = @transform_3, window_bounds = array<i64: 8, 128>}]} {
    %c0 = arith.constant 0 : index
    %c0_0 = arith.constant 0 : index
    %0 = vector.load %arg2[%c0, %c0_0] : memref<8x128xbf16, #tpu.memory_space<vmem>>, vector<8x128xbf16>
    %c0_1 = arith.constant 0 : index
    %c0_2 = arith.constant 0 : index
    %1 = vector.load %arg3[%c0_1, %c0_2] : memref<128x128xbf16, #tpu.memory_space<vmem>>, vector<128x128xbf16>
    %cst = arith.constant dense<0.000000e+00> : vector<8x128xf32>
    %2 = tpu.matmul %0, %1, %cst {dimension_numbers = #tpu.dot_dimension_numbers<[1], [0], [0], [1], [0, 0, 1, 1], [], []>} : vector<8x128xbf16>, vector<128x128xbf16>, vector<8x128xf32> -> vector<8x128xf32>
    %c0_3 = arith.constant 0 : index
    %c0_4 = arith.constant 0 : index
    %3 = vector.load %arg4[%c0_3, %c0_4] : memref<1x128xf32, #tpu.memory_space<vmem>>, vector<1x128xf32>
    %4 = vector.broadcast %3 : vector<1x128xf32> to vector<8x128xf32>
    %5 = arith.addf %2, %4 : vector<8x128xf32>
    %c0_5 = arith.constant 0 : index
    %c0_6 = arith.constant 0 : index
    %6 = vector.load %arg5[%c0_5, %c0_6] : memref<8x128xf32, #tpu.memory_space<vmem>>, vector<8x128xf32>
    tpu.vector_store %arg5[%c0_5, %c0_6], %5 {strides = array<i32>} : memref<8x128xf32, #tpu.memory_space<vmem>>, vector<8x128xf32>,
    return
  }
  func.func @transform_0(%arg0: i32, %arg1: i32) -> (i32, i32) {
    %c0_i32 = arith.constant 0 : i32
    %c0_i32_0 = arith.constant 0 : i32
    return %arg0, %c0_i32 : i32, i32
  }
  func.func @transform_1(%arg0: i32, %arg1: i32) -> (i32, i32) {
    %c0_i32 = arith.constant 0 : i32
    %c0_i32_0 = arith.constant 0 : i32
    return %c0_i32, %arg1 : i32, i32
  }
  func.func @transform_2(%arg0: i32, %arg1: i32) -> (i32, i32) {
    %c0_i32 = arith.constant 0 : i32
    %c0_i32_0 = arith.constant 0 : i32
    return %c0_i32, %arg1 : i32, i32
  }
  func.func @transform_3(%arg0: i32, %arg1: i32) -> (i32, i32) {
    %c0_i32 = arith.constant 0 : i32
    return %arg0, %arg1 : i32, i32
  }
}

</mosaic_0001>

<llo_original>
// kernel: tpu_custom_call.1
$region0: #{tpu_custom_call.1}
  #allocation0 [shape = 'u32[]', space=smem, size = 0x4, offset = 0x4, fixed_abs, tag = 'smem constant byte address 0x4 - core index']
  #allocation1 [shape = 'u32[144,128]{1,0:T(1,128)}', space=vmem, size = 0x12000, scoped, tag = 'internal scratch']
  %s0 = inlined_call_operand.hbm [shape: bf16[8,128], index: 0, kind: input, shape index: {}]
  %s1 = inlined_call_operand.hbm [shape: bf16[128,128], index: 1, kind: input, shape index: {}]
  %s2 = inlined_call_operand.vmem [shape: f32[1,128], index: 2, kind: input, shape index: {}]
  %s3 = inlined_call_operand.hbm [shape: f32[8,128], index: 3, kind: output, shape index: {}]
  %s4 = sld [smem:[#allocation0]]
  $region30: #{tpu_custom_call.1} parent=0
    _
  %s6 = ssub.s32 1, %s4
  %s7 = scalar_select 0, %s6, %s4
  $region1: #{tpu_custom_call.1} parent=0
    #allocation2 [shape = 'u8[2048]{0}', space=vmem, size = 0x800, scoped, tag = 'input window, operand 0, single buffered']
    #allocation3 [shape = 's32[1]{0}', space=sflag, size = 0x4, scoped, tag = 'scoped memory for tpu_custom_call.1']
    #allocation4 [shape = 's32[1]{0}', space=sflag, size = 0x4, scoped, tag = 'scoped memory for tpu_custom_call.1']
    #allocation5 [shape = 'u8[32768]{0}', space=vmem, size = 0x8000, scoped, tag = 'input window, operand 1, single buffered']
    #allocation6 [shape = 's32[1]{0}', space=sflag, size = 0x4, scoped, tag = 'scoped memory for tpu_custom_call.1']
    #allocation7 [shape = 'u8[4096]{0}', space=vmem, size = 0x1000, scoped, tag = 'output window, operand 0, single buffered']
    %8 = vsyncpa [#allocation3], 0
    %9 = vsyncpa [#allocation6], 0
    %10 = vsyncpa [#allocation4], 0
    // Predicated region
    $region2: #{tpu_custom_call.1} parent=1 // pred_check
      _
    $region3: #{tpu_custom_call.1} parent=1 // pred_check_branch
      %12 = sbr.rel (0) target = $region5
    $region4: #{tpu_custom_call.1} parent=1 // pred_region
      %s14 = ssub.s32 64, 64
      %15 = vsyncadd [#allocation3], %s14
      %s17 = sshll.u32 [#allocation2], 4
      %s18 = int_to_ptr.vmem [resolvable:$true] %s17
      %20 = dma.hbm_to_vmem [thread:$0]  %s0, 64, %s18, [#allocation3]
    $region5: #{tpu_custom_call.1} parent=1 // pred_fallthru
      _
    // Predicated region
    $region6: #{tpu_custom_call.1} parent=1 // pred_check
      _
    $region7: #{tpu_custom_call.1} parent=1 // pred_check_branch
      %22 = sbr.rel (0) target = $region9
    $region8: #{tpu_custom_call.1} parent=1 // pred_region
      %s24 = ssub.s32 1024, 1024
      %25 = vsyncadd [#allocation6], %s24
      %s26 = sshll.u32 [#allocation5], 4
      %s27 = int_to_ptr.vmem [resolvable:$true] %s26
      %32 = dma.hbm_to_vmem [thread:$0]  %s1, 1024, %s27, [#allocation6], 64, 64, 4
    $region9: #{tpu_custom_call.1} parent=1 // pred_fallthru
      _
    // Predicated region
    $region10: #{tpu_custom_call.1} parent=1 // pred_check
      _
    $region11: #{tpu_custom_call.1} parent=1 // pred_check_branch
      %34 = sbr.rel (0) target = $region13
    $region12: #{tpu_custom_call.1} parent=1 // pred_region
      _
    $region13: #{tpu_custom_call.1} parent=1 // pred_fallthru
      _
    // Predicated region
    $region14: #{tpu_custom_call.1} parent=1 // pred_check
      _
    $region15: #{tpu_custom_call.1} parent=1 // pred_check_branch
      %36 = sbr.rel (0) target = $region17
    $region16: #{tpu_custom_call.1} parent=1 // pred_region
      %37 = dma.done [#allocation3], 64
    $region17: #{tpu_custom_call.1} parent=1 // pred_fallthru
      _
    // Predicated region
    $region18: #{tpu_custom_call.1} parent=1 // pred_check
      _
    $region19: #{tpu_custom_call.1} parent=1 // pred_check_branch
      %39 = sbr.rel (0) target = $region21
    $region20: #{tpu_custom_call.1} parent=1 // pred_region
      %40 = dma.done [#allocation6], 1024
    $region21: #{tpu_custom_call.1} parent=1 // pred_fallthru
      _
    %v42 = vld [vmem:[#allocation2] sm:$0xf]
    %v43 = vld [vmem:[#allocation5] sm:$0xf]
    %v44 = vld [vmem:[#allocation5 + $0x4] sm:$0xf]
    %v45 = vld [vmem:[#allocation5 + $0x8] sm:$0xf]
    %v46 = vld [vmem:[#allocation5 + $0xc] sm:$0xf]
    %v47 = vld [vmem:[#allocation5 + $0x10] sm:$0xf]
    %v48 = vld [vmem:[#allocation5 + $0x14] sm:$0xf]
    %v49 = vld [vmem:[#allocation5 + $0x18] sm:$0xf]
    %v50 = vld [vmem:[#allocation5 + $0x1c] sm:$0xf]
    %v51 = vld [vmem:[#allocation5 + $0x20] sm:$0xf]
    %v52 = vld [vmem:[#allocation5 + $0x24] sm:$0xf]
    %v53 = vld [vmem:[#allocation5 + $0x28] sm:$0xf]
    %v54 = vld [vmem:[#allocation5 + $0x2c] sm:$0xf]
    %v55 = vld [vmem:[#allocation5 + $0x30] sm:$0xf]
    %v56 = vld [vmem:[#allocation5 + $0x34] sm:$0xf]
    %v57 = vld [vmem:[#allocation5 + $0x38] sm:$0xf]
    %v58 = vld [vmem:[#allocation5 + $0x3c] sm:$0xf]
    %v59 = vld [vmem:[%s2] sm:$0x1]
    %v61 = vlaneseq
    %v62 = vshrl.u32 %v61, 7
    %v63 = vsub.s32 0, %v62
    %v64 = vrot.slane %v59, %v63
    %v82 = vunpack.c.l.b16 %v43
    %v83 = vunpack.c.l.b16 %v44
    %v84 = vunpack.c.l.b16 %v45
    %v85 = vunpack.c.l.b16 %v46
    %v86 = vunpack.c.l.b16 %v47
    %v87 = vunpack.c.l.b16 %v48
    %v88 = vunpack.c.l.b16 %v49
    %v89 = vunpack.c.l.b16 %v50
    %v90 = vunpack.c.l.b16 %v51
    %v91 = vunpack.c.l.b16 %v52
    %v92 = vunpack.c.l.b16 %v53
    %v93 = vunpack.c.l.b16 %v54
    %v94 = vunpack.c.l.b16 %v55
    %v95 = vunpack.c.l.b16 %v56
    %v96 = vunpack.c.l.b16 %v57
    %v97 = vunpack.c.l.b16 %v58
    %v98 = vpack.c.b16 %v83, %v82
    %v99 = vpack.c.b16 %v85, %v84
    %v100 = vpack.c.b16 %v87, %v86
    %v101 = vpack.c.b16 %v89, %v88
    %v102 = vpack.c.b16 %v91, %v90
    %v103 = vpack.c.b16 %v93, %v92
    %v104 = vpack.c.b16 %v95, %v94
    %v105 = vpack.c.b16 %v97, %v96
    %114 = vmatprep.subr.bf16.mxu0 0
    %115 = vmatpush1.bf16.msra.mxu0 %v98
    %116 = vmatprep.subr.bf16.mxu0 0
    %117 = vmatpush1.bf16.msra.mxu0 %v99
    %118 = vmatprep.subr.bf16.mxu0 0
    %119 = vmatpush1.bf16.msra.mxu0 %v100
    %120 = vmatprep.subr.bf16.mxu0 0
    %121 = vmatpush1.bf16.msra.mxu0 %v101
    %122 = vmatprep.subr.bf16.mxu0 0
    %123 = vmatpush1.bf16.msra.mxu0 %v102
    %124 = vmatprep.subr.bf16.mxu0 0
    %125 = vmatpush1.bf16.msra.mxu0 %v103
    %126 = vmatprep.subr.bf16.mxu0 0
    %127 = vmatpush1.bf16.msra.mxu0 %v104
    %128 = vmatprep.subr.bf16.mxu0 0
    %129 = vmatpush1.bf16.msra.mxu0 %v105
    %130 = vmatprep.subr.bf16.mxu0 0
    %131 = vmatpush1.bf16.msra.mxu0 0
    %132 = vmatprep.subr.bf16.mxu0 0
    %133 = vmatpush1.bf16.msra.mxu0 0
    %134 = vmatprep.subr.bf16.mxu0 0
    %135 = vmatpush1.bf16.msra.mxu0 0
    %136 = vmatprep.subr.bf16.mxu0 0
    %137 = vmatpush1.bf16.msra.mxu0 0
    %138 = vmatprep.subr.bf16.mxu0 0
    %139 = vmatpush1.bf16.msra.mxu0 0
    %140 = vmatprep.subr.bf16.mxu0 0
    %141 = vmatpush1.bf16.msra.mxu0 0
    %142 = vmatprep.subr.bf16.mxu0 0
    %143 = vmatpush1.bf16.msra.mxu0 0
    %144 = vmatprep.subr.bf16.mxu0 0
    %145 = vmatpush1.bf16.msra.mxu0 0
    %146 = vmatprep.mubr.bf16.mxu0 0
    %147 = vmatmul.mubr.bf16.gmra.mrb[0].mxu0 %v42
    %v148 = vpop.f32.mrb[0].mxu0
    %v149 = vadd.f32 %v64, %v148
    %v150 = vpop.f32.mrb[0].mxu0
    %v151 = vpop.f32.mrb[0].mxu0
    %v152 = vpop.f32.mrb[0].mxu0
    %153 = vdwg.mxu0
    %154 = vst [vmem:[#allocation7] sm:$0xff] %v149
    // Predicated region
    $region22: #{tpu_custom_call.1} parent=1 // pred_check
      _
    $region23: #{tpu_custom_call.1} parent=1 // pred_check_branch
      %156 = sbr.rel (0) target = $region25
    $region24: #{tpu_custom_call.1} parent=1 // pred_region
      %s158 = ssub.s32 128, 128
      %159 = vsyncadd [#allocation4], %s158
      %s161 = sshll.u32 [#allocation7], 4
      %s162 = int_to_ptr.vmem [resolvable:$true] %s161
      %164 = dma.vmem_to_hbm [thread:$0]  %s162, 128, %s3, [#allocation4]
    $region25: #{tpu_custom_call.1} parent=1 // pred_fallthru
      _
    // Predicated region
    $region26: #{tpu_custom_call.1} parent=1 // pred_check
      _
    $region27: #{tpu_custom_call.1} parent=1 // pred_check_branch
      %166 = sbr.rel (0) target = $region29
    $region28: #{tpu_custom_call.1} parent=1 // pred_region
      %167 = dma.done [#allocation4], 128
    $region29: #{tpu_custom_call.1} parent=1 // pred_fallthru
      _
    %168 = vsyncpa [#allocation3], 1
    %169 = vsyncpa [#allocation6], 1
    %170 = vsyncpa [#allocation4], 1

</llo_original>
